<compile_context>
chip_gen: v6e
topology: v6e:2x2x1
jax: 0.10.0
libtpu: 0.0.40
codegen_flags: <defaults>
</compile_context>

<pallas_src>
import jax
import jax.numpy as jnp
from jax.experimental import pallas as pl
from jax.experimental.pallas import tpu as pltpu


def _transpose_tile_kernel(x_ref, o_ref):
    # x_ref block: (T_C, T_HW)  -- lane-dense loads: H*W sits on the 128-lane axis
    # o_ref block: (T_HW, T_C)  -- small, vreg-resident XLU transpose per tile
    # TODO(synk): on v5e with bf16/int8 inputs, check the packed-sublane
    # transpose lowering; widen to f32 (or bitcast channel pairs to 32-bit)
    # before the transpose if it hits an unpack/relayout path.
    o_ref[...] = x_ref[...].T


def _pick_tile(n, align, cap):
    """Largest tile <= cap; a multiple of `align` unless it covers the full dim.

    Prefers exact divisors of n so every grid step is a full block; if no
    aligned divisor exists, falls back to `cap` (Pallas masks the partial
    boundary block, which is safe for pure data movement).
    """
    if n <= cap:
        return n
    cap = max(align, (cap // align) * align)
    t = cap
    while t >= align:
        if n % t == 0:
            return t
        t -= align
    return cap


def _vmem_budget_and_limit():
    """(per-step tile budget, explicit scoped-VMEM limit) per TPU generation."""
    try:
        vmem_cap = pltpu.get_tpu_info().vmem_capacity_bytes
    except Exception:
        vmem_cap = 64 * 1024 * 1024  # conservative fallback: v7x per-TC VMEM
    if vmem_cap >= 128 * 1024 * 1024:
        # v5e / v6e: 128 MiB physical VMEM. Bigger tiles cut per-step overhead;
        # the explicit limit below makes them actually compile on both.
        return 24 * 1024 * 1024, 64 * 1024 * 1024
    # v7x: 64 MiB per TensorCore -> keep the per-step footprint modest and the
    # scoped limit <= ~48 MiB so Mosaic scratch still fits.
    return 16 * 1024 * 1024, 48 * 1024 * 1024


def einops_rearrange_b_c_h_w__b_hw_c(x):
    """Pallas implementation of einops.rearrange(x, 'b c h w -> b (h w) c')."""
    B, C, H, W = x.shape
    HW = H * W
    itemsize = jnp.dtype(x.dtype).itemsize

    budget, vmem_limit = _vmem_budget_and_limit()

    # Free, contiguous reshape in the wrapper: put H*W on the lane axis.
    x2 = x.reshape(B, C, HW)

    # Prefer full C (contiguous output writeback); only tile C when it is very
    # large, and then keep output rows >= 2 KiB (t_c multiple of 512 lanes).
    if C > 2048:
        t_c = _pick_tile(C, 512, 2048)
    else:
        t_c = C

    # Lane-dense HW tile: per-step footprint ~= 2 bufs * (in + out) blocks
    # = 4 * t_c * t_hw * itemsize. Enforce a >= 512-lane row floor and a 4096
    # ceiling (roofline already saturates around 512-1024-wide tiles).
    hw_cap = max(512, budget // (4 * t_c * itemsize))
    t_hw = _pick_tile(HW, 128, min(4096, hw_cap))

    # HW-tile axis innermost: sequential HBM streaming for reads and writes.
    grid = (B, pl.cdiv(C, t_c), pl.cdiv(HW, t_hw))

    cost = pl.CostEstimate(
        flops=0,
        transcendentals=0,
        bytes_accessed=2 * B * C * HW * itemsize,
    )

    # TODO(synk): when C < 128 the (t_hw, C) output VMEM stores are lane-sparse
    # (masked vst); the HBM writeback is still contiguous since the block spans
    # full C, but the real fix for tiny-channel tensors is fusing this
    # rearrange into the consumer or packing 128//C HW rows per lane-dense slab.
    return pl.pallas_call(
        _transpose_tile_kernel,
        out_shape=jax.ShapeDtypeStruct((B, HW, C), x.dtype),
        grid=grid,
        in_specs=[
            pl.BlockSpec((pl.Squeezed(), t_c, t_hw), lambda b, ci, hi: (b, ci, hi))
        ],
        out_specs=pl.BlockSpec(
            (pl.Squeezed(), t_hw, t_c), lambda b, ci, hi: (b, hi, ci)
        ),
        compiler_params=pltpu.CompilerParams(
            dimension_semantics=("parallel", "parallel", "parallel"),
            vmem_limit_bytes=vmem_limit,
        ),
        cost_estimate=cost,
    )(x2)


if __name__ == "__main__":
    key = jax.random.PRNGKey(0)
    x = jax.random.normal(key, (2, 4, 16, 16), dtype=jnp.float32)

    out = einops_rearrange_b_c_h_w__b_hw_c(x)
    out = jax.block_until_ready(out)

    # Reference: einops.rearrange(x, "b c h w -> b (h w) c")
    ref = jnp.transpose(x, (0, 2, 3, 1)).reshape(x.shape[0], -1, x.shape[1])
    assert out.shape == ref.shape, (out.shape, ref.shape)
    assert out.dtype == ref.dtype, (out.dtype, ref.dtype)
    assert jnp.array_equal(out, ref), "mismatch vs reference rearrange"

    print("KERNEL_OK")
</pallas_src>

<mosaic_0001>
module attributes {stable_mosaic.version = 11 : i64} {
  func.func @_transpose_tile_kernel(%arg0: i32, %arg1: i32, %arg2: i32, %arg3: memref<1x4x256xf32, #tpu.memory_space<vmem>>, %arg4: memref<1x256x4xf32, #tpu.memory_space<vmem>>) attributes {dimension_semantics = [#tpu.dimension_semantics<parallel>, #tpu.dimension_semantics<parallel>, #tpu.dimension_semantics<parallel>], iteration_bounds = array<i64: 2, 1, 1>, scalar_prefetch = 0 : i64, scratch_operands = 0 : i64, tpu.core_type = #tpu.core_type<tc>, window_params = [{transform_indices = @transform_0, window_bounds = array<i64: 1, 4, 256>}, {transform_indices = @transform_1, window_bounds = array<i64: 1, 256, 4>}]} {
    %c0 = arith.constant 0 : index
    %c0_0 = arith.constant 0 : index
    %c0_1 = arith.constant 0 : index
    %0 = vector.load %arg3[%c0, %c0_0, %c0_1] : memref<1x4x256xf32, #tpu.memory_space<vmem>>, vector<1x4x256xf32>
    %1 = vector.shape_cast %0 : vector<1x4x256xf32> to vector<4x256xf32>
    %2 = tpu.transpose %1, [1, 0] : vector<4x256xf32> -> vector<256x4xf32>
    %c0_2 = arith.constant 0 : index
    %c0_3 = arith.constant 0 : index
    %c0_4 = arith.constant 0 : index
    %3 = vector.load %arg4[%c0_2, %c0_3, %c0_4] : memref<1x256x4xf32, #tpu.memory_space<vmem>>, vector<1x256x4xf32>
    %4 = vector.shape_cast %3 : vector<1x256x4xf32> to vector<256x4xf32>
    %5 = vector.shape_cast %2 : vector<256x4xf32> to vector<1x256x4xf32>
    tpu.vector_store %arg4[%c0_2, %c0_3, %c0_4], %5 {strides = array<i32>} : memref<1x256x4xf32, #tpu.memory_space<vmem>>, vector<1x256x4xf32>,
    return
  }
  func.func @transform_0(%arg0: i32, %arg1: i32, %arg2: i32) -> (i32, i32, i32) {
    %c0_i32 = arith.constant 0 : i32
    return %arg0, %arg1, %arg2 : i32, i32, i32
  }
  func.func @transform_1(%arg0: i32, %arg1: i32, %arg2: i32) -> (i32, i32, i32) {
    %c0_i32 = arith.constant 0 : i32
    return %arg0, %arg2, %arg1 : i32, i32, i32
  }
}

</mosaic_0001>

<llo_original>
// kernel: tpu_custom_call.1
$region0: #{tpu_custom_call.1}
  #allocation0 [shape = 'u32[]', space=smem, size = 0x4, offset = 0x4, fixed_abs, tag = 'smem constant byte address 0x4 - core index']
  #allocation1 [shape = 'u32[144,128]{1,0:T(1,128)}', space=vmem, size = 0x12000, scoped, tag = 'internal scratch']
  %s0 = inlined_call_operand.hbm [shape: f32[2,4,256], index: 0, kind: input, shape index: {}]
  %s1 = inlined_call_operand.vmem [shape: f32[2,256,4], index: 1, kind: output, shape index: {}]
  %s2 = sld [smem:[#allocation0]]
  $region41: #{tpu_custom_call.1} parent=0
    _
  %s4 = ssub.s32 1, %s2
  %s5 = scalar_select 0, %s4, %s2
  $region1: #{tpu_custom_call.1} parent=0
    #allocation2 [shape = 'u8[8192]{0}', space=vmem, size = 0x2000, scoped, tag = 'input window, operand 0']
    #allocation3 [shape = 's32[2]{0}', space=sflag, size = 0x8, scoped, tag = 'scoped memory for tpu_custom_call.1']
    %6 = vsyncpa [#allocation3], 0
    %s7 = scalar_lea.sflag [#allocation3], 1
    %8 = vsyncpa %s7, 0
    loop: start=0, step=1, limit=4
    $region2: #{tpu_custom_call.1} parent=1 // loop_pre_header
      _
    $region3: #{tpu_custom_call.1} parent=1 // loop_header
      %s10 = sphi 0, %s14
      %p11 = scmp.ge.s32.totalorder %s10, 4
      %s17 = sphi 0, %s36
      %s18 = sphi 0, %s32
      %s19 = sphi 0, %s28
      %s20 = sphi 0, %s17
      %s21 = sphi 0, %s18
      %s22 = sphi 0, %s19
      %s23 = sphi 0, %s20
      %s24 = sphi 0, %s21
      %s25 = sphi 0, %s22
      %s43 = sphi 0, %s45
      %s46 = sphi 0, %s43
      %s47 = sphi 0, %s46
      %s63 = sphi 0, %s47
      %s73 = sphi 0, %s75
      %s76 = sphi 0, %s73
      %s77 = sphi 0, %s76
      %s93 = sphi 0, %s77
    $region4: #{tpu_custom_call.1} parent=1 // loop_header_branch
      %13 = sbr.rel (%p11) target = $region8
    $region5: #{tpu_custom_call.1} parent=1 // loop_body
      %s15 = ssub.s32 %s10, 1
      %s16 = ssub.s32 %s10, 2
      %s26 = sadd.s32 1, %s19
      %p27 = scmp.ge.s32.totalorder %s26, 1
      %s28 = scalar_select %p27, 0, %s26
      %s29 = sadd.s32 1, %s18
      %s30 = scalar_select %p27, %s29, %s18
      %p31 = scmp.ge.s32.totalorder %s30, 1
      %s32 = scalar_select %p31, 0, %s30
      %s33 = sadd.s32 1, %s17
      %s34 = scalar_select %p31, %s33, %s17
      %p35 = scmp.ge.s32.totalorder %s34, 2
      %s36 = scalar_select %p35, 0, %s34
      %s37 = ssub.s32 %s17, %s36
      %s38 = ssub.s32 %s18, %s32
      %s39 = sor.u32 %s37, %s38
      %s40 = ssub.s32 %s19, %s28
      %s41 = sor.u32 %s39, %s40
      %p42 = scmp.eq.s32.totalorder %s41, 0
      %s44 = sadd.s32 %s43, 1
      %s45 = scalar_select %p42, %s43, %s44
      %p48 = pneg %p42
      %p49 = scmp.eq.s32.totalorder %s10, 1
      %p50 = por %p48, %p49
      %p51 = scmp.ne.s32.totalorder %s43, %s46
      %p52 = scmp.eq.s32.totalorder %s10, 0
      %p53 = por %p51, %p52
      %p54 = scmp.ne.s32.totalorder %s43, %s46
      %p55 = scmp.eq.s32.totalorder %s15, 1
      %p56 = por %p54, %p55
      %p57 = scmp.ne.s32.totalorder %s46, %s47
      %p58 = scmp.eq.s32.totalorder %s15, 0
      %p59 = por %p57, %p58
      %p60 = scmp.ne.s32.totalorder %s46, %s47
      %p61 = scmp.eq.s32.totalorder %s16, 1
      %p62 = por %p60, %p61
      %p64 = scmp.ne.s32.totalorder %s47, %s63
      %p65 = scmp.eq.s32.totalorder %s16, 0
      %p66 = por %p64, %p65
      %s67 = ssub.s32 %s17, %s36
      %s68 = ssub.s32 %s19, %s28
      %s69 = sor.u32 %s67, %s68
      %s70 = ssub.s32 %s18, %s32
      %s71 = sor.u32 %s69, %s70
      %p72 = scmp.eq.s32.totalorder %s71, 0
      %s74 = sadd.s32 %s73, 1
      %s75 = scalar_select %p72, %s73, %s74
      %p78 = pneg %p72
      %p79 = scmp.eq.s32.totalorder %s10, 1
      %p80 = por %p78, %p79
      %p81 = scmp.ne.s32.totalorder %s73, %s76
      %p82 = scmp.eq.s32.totalorder %s10, 0
      %p83 = por %p81, %p82
      %p84 = scmp.ne.s32.totalorder %s73, %s76
      %p85 = scmp.eq.s32.totalorder %s15, 1
      %p86 = por %p84, %p85
      %p87 = scmp.ne.s32.totalorder %s76, %s77
      %p88 = scmp.eq.s32.totalorder %s15, 0
      %p89 = por %p87, %p88
      %p90 = scmp.ne.s32.totalorder %s76, %s77
      %p91 = scmp.eq.s32.totalorder %s16, 1
      %p92 = por %p90, %p91
      %p94 = scmp.ne.s32.totalorder %s77, %s93
      %p95 = scmp.eq.s32.totalorder %s16, 0
      %p96 = por %p94, %p95
      %p97 = scmp.le.s32.totalorder 1, %s10
      %p98 = scmp.lt.s32.totalorder %s10, 3
      %p99 = pnand %p97, %p98
      %p100 = pneg %p99
      // Predicated region
      $region9: #{tpu_custom_call.1} parent=5 // pred_check
        _
      $region10: #{tpu_custom_call.1} parent=5 // pred_check_branch
        %102 = sbr.rel (%p99) target = $region12
      $region11: #{tpu_custom_call.1} parent=5 // pred_region
        %s103 = ssub.s32 %s10, 1
      $region12: #{tpu_custom_call.1} parent=5 // pred_fallthru
        _
      %p104 = scmp.lt.s32.totalorder %s10, 2
      // Predicated region
      $region13: #{tpu_custom_call.1} parent=5 // pred_check
        %p105 = pneg %p104
      $region14: #{tpu_custom_call.1} parent=5 // pred_check_branch
        %107 = sbr.rel (%p105) target = $region16
      $region15: #{tpu_custom_call.1} parent=5 // pred_region
        // Predicated region
        $region17: #{tpu_custom_call.1} parent=15 // pred_check
          %p108 = pneg %p53
        $region18: #{tpu_custom_call.1} parent=15 // pred_check_branch
          %110 = sbr.rel (%p108) target = $region20
        $region19: #{tpu_custom_call.1} parent=15 // pred_region
          %s111 = sand.u32 %s43, 1
          %s112 = scalar_lea.sflag [#allocation3], %s111
          %s113 = sand.u32 %s43, 1
          %s114 = smul.addr %s113, 8
          %s115 = scalar_lea.vmem [#allocation2], %s114
          %s116 = smul.u32 2, %s19
          %s118 = ssub.s32 128, 128
          %119 = vsyncadd %s112, %s118
          %s120 = smul.addr %s18, 2
          %s121 = sadd.s32 %s116, %s120
          %s122 = smul.addr %s17, 2
          %s123 = sadd.s32 %s121, %s122
          %s124 = smul.addr %s123, 64
          %s125 = scalar_lea.hbm %s0, %s124
          %s127 = sshll.u32 %s115, 4
          %s128 = int_to_ptr.vmem [resolvable:$true] %s127
          %130 = dma.hbm_to_vmem [thread:$0]  %s125, 128, %s128, %s112
        $region20: #{tpu_custom_call.1} parent=15 // pred_fallthru
          _
      $region16: #{tpu_custom_call.1} parent=5 // pred_fallthru
        _
      %p131 = scmp.le.s32.totalorder 1, %s10
      %p132 = scmp.lt.s32.totalorder %s10, 3
      %p133 = pnand %p131, %p132
      %p134 = pneg %p133
      // Predicated region
      $region21: #{tpu_custom_call.1} parent=5 // pred_check
        _
      $region22: #{tpu_custom_call.1} parent=5 // pred_check_branch
        %136 = sbr.rel (%p133) target = $region24
      $region23: #{tpu_custom_call.1} parent=5 // pred_region
        %s137 = ssub.s32 %s10, 1
        %s138 = sand.u32 %s46, 1
        %s139 = scalar_lea.sflag [#allocation3], %s138
        %s140 = sand.u32 %s46, 1
        %s141 = smul.addr %s140, 8
        %s142 = scalar_lea.vmem [#allocation2], %s141
        // Predicated region
        $region25: #{tpu_custom_call.1} parent=23 // pred_check
          %p143 = pneg %p59
        $region26: #{tpu_custom_call.1} parent=23 // pred_check_branch
          %145 = sbr.rel (%p143) target = $region28
        $region27: #{tpu_custom_call.1} parent=23 // pred_region
          %146 = dma.done %s139, 128
        $region28: #{tpu_custom_call.1} parent=23 // pred_fallthru
          _
        %s147 = sand.u32 %s46, 1
        %s148 = scalar_lea.sflag [#allocation3], %s147
        %s149 = sand.u32 %s46, 1
        %s150 = smul.addr %s149, 8
        %s151 = scalar_lea.vmem [#allocation2], %s150
        %p152 = pneg %p59
        %p153 = pneg %p56
        %p154 = pneg %p89
        %p155 = pneg %p86
        %s156 = smul.u32 32, %s22
        %p157 = scmp.lt.s32.totalorder %s20, 1
        %s158 = scalar_select %p157, %s20, 1
        %p159 = scmp.lt.s32.totalorder %s156, 31
        %s160 = scalar_select %p159, %s156, 31
        %p161 = scmp.lt.s32.totalorder %s21, 0
        %s162 = scalar_select %p161, %s21, 0
        %s163 = sadd.s32 %s162, %s160
        %s164 = smul.addr %s158, 32
        %s165 = sadd.s32 %s163, %s164
        %s166 = smul.addr %s165, 8
        %s167 = scalar_lea.vmem %s1, %s166
        %s168 = smul.u32 2, %s22
        %s169 = smul.u32 32, %s22
        %p170 = scmp.lt.s32.totalorder %s20, 1
        %s171 = scalar_select %p170, %s20, 1
        %p172 = scmp.lt.s32.totalorder %s169, 31
        %s173 = scalar_select %p172, %s169, 31
        %p174 = scmp.lt.s32.totalorder %s21, 0
        %s175 = scalar_select %p174, %s21, 0
        %s176 = sadd.s32 %s175, %s173
        %s177 = smul.addr %s171, 32
        %s178 = sadd.s32 %s176, %s177
        %s179 = smul.addr %s178, 8
        %s180 = scalar_lea.vmem %s1, %s179
        %s181 = smul.u32 32, %s22
        %v182 = vld [vmem:[%s142] sm:$0xff]
        %v184 = vcombine.high %v182, %v182
        %186 = vxpose.xlu0.b32.start [1/16] %v182, 128
        %187 = vxpose.xlu0.b32.cont [2/16] 0.0, 128
        %188 = vxpose.xlu0.b32.cont [3/16] 0.0, 128
        %189 = vxpose.xlu0.b32.cont [4/16] 0.0, 128
        %190 = vxpose.xlu0.b32.cont [5/16] 0.0, 128
        %191 = vxpose.xlu0.b32.cont [6/16] 0.0, 128
        %192 = vxpose.xlu0.b32.cont [7/16] 0.0, 128
        %193 = vxpose.xlu0.b32.cont [8/16] 0.0, 128
        %194 = vxpose.xlu0.b32.cont [9/16] 0.0, 128
        %195 = vxpose.xlu0.b32.cont [10/16] 0.0, 128
        %196 = vxpose.xlu0.b32.cont [11/16] 0.0, 128
        %197 = vxpose.xlu0.b32.cont [12/16] 0.0, 128
        %198 = vxpose.xlu0.b32.cont [13/16] 0.0, 128
        %199 = vxpose.xlu0.b32.cont [14/16] 0.0, 128
        %200 = vxpose.xlu0.b32.cont [15/16] 0.0, 128
        %201 = vxpose.xlu0.b32.end [16/16] 0.0, 128
        %v202 = vpop.trf.xlu0
        %v203 = vpop.trf.xlu0
        %v204 = vpop.trf.xlu0
        %v205 = vpop.trf.xlu0
        %v206 = vpop.trf.xlu0
        %v207 = vpop.trf.xlu0
        %v208 = vpop.trf.xlu0
        %v209 = vpop.trf.xlu0
        %v210 = vpop.trf.xlu0
        %v211 = vpop.trf.xlu0
        %v212 = vpop.trf.xlu0
        %v213 = vpop.trf.xlu0
        %v214 = vpop.trf.xlu0
        %v215 = vpop.trf.xlu0
        %v216 = vpop.trf.xlu0
        %v217 = vpop.trf.xlu0
        %218 = vxpose.xlu0.b32.start [1/16] %v184, 128
        %219 = vxpose.xlu0.b32.cont [2/16] 0.0, 128
        %220 = vxpose.xlu0.b32.cont [3/16] 0.0, 128
        %221 = vxpose.xlu0.b32.cont [4/16] 0.0, 128
        %222 = vxpose.xlu0.b32.cont [5/16] 0.0, 128
        %223 = vxpose.xlu0.b32.cont [6/16] 0.0, 128
        %224 = vxpose.xlu0.b32.cont [7/16] 0.0, 128
        %225 = vxpose.xlu0.b32.cont [8/16] 0.0, 128
        %226 = vxpose.xlu0.b32.cont [9/16] 0.0, 128
        %227 = vxpose.xlu0.b32.cont [10/16] 0.0, 128
        %228 = vxpose.xlu0.b32.cont [11/16] 0.0, 128
        %229 = vxpose.xlu0.b32.cont [12/16] 0.0, 128
        %230 = vxpose.xlu0.b32.cont [13/16] 0.0, 128
        %231 = vxpose.xlu0.b32.cont [14/16] 0.0, 128
        %232 = vxpose.xlu0.b32.cont [15/16] 0.0, 128
        %233 = vxpose.xlu0.b32.end [16/16] 0.0, 128
        %v234 = vpop.trf.xlu0
        %v235 = vpop.trf.xlu0
        %v236 = vpop.trf.xlu0
        %v237 = vpop.trf.xlu0
        %v238 = vpop.trf.xlu0
        %v239 = vpop.trf.xlu0
        %v240 = vpop.trf.xlu0
        %v241 = vpop.trf.xlu0
        %v242 = vpop.trf.xlu0
        %v243 = vpop.trf.xlu0
        %v244 = vpop.trf.xlu0
        %v245 = vpop.trf.xlu0
        %v246 = vpop.trf.xlu0
        %v247 = vpop.trf.xlu0
        %v248 = vpop.trf.xlu0
        %v249 = vpop.trf.xlu0
        %vm250 = vcmask 31744
        %251 = vst.msk [vmem:[%s180] sm:$0xff] %vm250, %v202
        %252 = vst.msk [vmem:[%s180 + $0x8] sm:$0xff] %vm250, %v203
        %253 = vst.msk [vmem:[%s180 + $0x10] sm:$0xff] %vm250, %v204
        %254 = vst.msk [vmem:[%s180 + $0x18] sm:$0xff] %vm250, %v205
        %255 = vst.msk [vmem:[%s180 + $0x20] sm:$0xff] %vm250, %v206
        %256 = vst.msk [vmem:[%s180 + $0x28] sm:$0xff] %vm250, %v207
        %257 = vst.msk [vmem:[%s180 + $0x30] sm:$0xff] %vm250, %v208
        %258 = vst.msk [vmem:[%s180 + $0x38] sm:$0xff] %vm250, %v209
        %259 = vst.msk [vmem:[%s180 + $0x40] sm:$0xff] %vm250, %v210
        %260 = vst.msk [vmem:[%s180 + $0x48] sm:$0xff] %vm250, %v211
        %261 = vst.msk [vmem:[%s180 + $0x50] sm:$0xff] %vm250, %v212
        %262 = vst.msk [vmem:[%s180 + $0x58] sm:$0xff] %vm250, %v213
        %263 = vst.msk [vmem:[%s180 + $0x60] sm:$0xff] %vm250, %v214
        %264 = vst.msk [vmem:[%s180 + $0x68] sm:$0xff] %vm250, %v215
        %265 = vst.msk [vmem:[%s180 + $0x70] sm:$0xff] %vm250, %v216
        %266 = vst.msk [vmem:[%s180 + $0x78] sm:$0xff] %vm250, %v217
        %267 = vst.msk [vmem:[%s180 + $0x80] sm:$0xff] %vm250, %v234
        %268 = vst.msk [vmem:[%s180 + $0x88] sm:$0xff] %vm250, %v235
        %269 = vst.msk [vmem:[%s180 + $0x90] sm:$0xff] %vm250, %v236
        %270 = vst.msk [vmem:[%s180 + $0x98] sm:$0xff] %vm250, %v237
        %271 = vst.msk [vmem:[%s180 + $0xa0] sm:$0xff] %vm250, %v238
        %272 = vst.msk [vmem:[%s180 + $0xa8] sm:$0xff] %vm250, %v239
        %273 = vst.msk [vmem:[%s180 + $0xb0] sm:$0xff] %vm250, %v240
        %274 = vst.msk [vmem:[%s180 + $0xb8] sm:$0xff] %vm250, %v241
        %275 = vst.msk [vmem:[%s180 + $0xc0] sm:$0xff] %vm250, %v242
        %276 = vst.msk [vmem:[%s180 + $0xc8] sm:$0xff] %vm250, %v243
        %277 = vst.msk [vmem:[%s180 + $0xd0] sm:$0xff] %vm250, %v244
        %278 = vst.msk [vmem:[%s180 + $0xd8] sm:$0xff] %vm250, %v245
        %279 = vst.msk [vmem:[%s180 + $0xe0] sm:$0xff] %vm250, %v246
        %280 = vst.msk [vmem:[%s180 + $0xe8] sm:$0xff] %vm250, %v247
        %281 = vst.msk [vmem:[%s180 + $0xf0] sm:$0xff] %vm250, %v248
        %282 = vst.msk [vmem:[%s180 + $0xf8] sm:$0xff] %vm250, %v249
        %s283 = smul.u32 32, %s22
        %p284 = scmp.lt.s32.totalorder %s20, 1
        %s285 = scalar_select %p284, %s20, 1
        %p286 = scmp.lt.s32.totalorder %s283, 31
        %s287 = scalar_select %p286, %s283, 31
        %p288 = scmp.lt.s32.totalorder %s21, 0
        %s289 = scalar_select %p288, %s21, 0
        %s290 = sadd.s32 %s289, %s287
        %s291 = smul.addr %s285, 32
        %s292 = sadd.s32 %s290, %s291
        %s293 = smul.addr %s292, 8
        %s294 = scalar_lea.vmem %s1, %s293
        // Predicated region
        $region29: #{tpu_custom_call.1} parent=23 // pred_check
          %p295 = pneg %p86
        $region30: #{tpu_custom_call.1} parent=23 // pred_check_branch
          %297 = sbr.rel (%p295) target = $region32
        $region31: #{tpu_custom_call.1} parent=23 // pred_region
          %s298 = smul.u32 32, %s22
        $region32: #{tpu_custom_call.1} parent=23 // pred_fallthru
          _
      $region24: #{tpu_custom_call.1} parent=5 // pred_fallthru
        _
      %p299 = scmp.le.s32.totalorder 2, %s10
      // Predicated region
      $region33: #{tpu_custom_call.1} parent=5 // pred_check
        %p300 = pneg %p299
      $region34: #{tpu_custom_call.1} parent=5 // pred_check_branch
        %302 = sbr.rel (%p300) target = $region36
      $region35: #{tpu_custom_call.1} parent=5 // pred_region
        %s303 = ssub.s32 %s10, 2
        // Predicated region
        $region37: #{tpu_custom_call.1} parent=35 // pred_check
          %p304 = pneg %p92
        $region38: #{tpu_custom_call.1} parent=35 // pred_check_branch
          %306 = sbr.rel (%p304) target = $region40
        $region39: #{tpu_custom_call.1} parent=35 // pred_region
          %s307 = smul.u32 32, %s25
          %p308 = scmp.lt.s32.totalorder %s23, 1
          %s309 = scalar_select %p308, %s23, 1
          %p310 = scmp.lt.s32.totalorder %s307, 31
          %s311 = scalar_select %p310, %s307, 31
          %p312 = scmp.lt.s32.totalorder %s24, 0
          %s313 = scalar_select %p312, %s24, 0
          %s314 = sadd.s32 %s313, %s311
          %s315 = smul.addr %s309, 32
          %s316 = sadd.s32 %s314, %s315
          %s317 = smul.addr %s316, 8
          %s318 = scalar_lea.vmem %s1, %s317
        $region40: #{tpu_custom_call.1} parent=35 // pred_fallthru
          _
      $region36: #{tpu_custom_call.1} parent=5 // pred_fallthru
        _
    $region6: #{tpu_custom_call.1} parent=1 // loop_footer
      %s14 = sadd.s32 1, %s10
    $region7: #{tpu_custom_call.1} parent=1 // loop_footer_branch
      %9 = sbr.rel target = $region3
    $region8: #{tpu_custom_call.1} parent=1 // loop_exit
      _
    %319 = vsyncpa [#allocation3], 1
    %s320 = scalar_lea.sflag [#allocation3], 1
    %321 = vsyncpa %s320, 1

</llo_original>
